<compile_context>
chip_gen: v6e
topology: v6e:2x2x1
jax: 0.10.0
libtpu: 0.0.40
codegen_flags: <defaults>
</compile_context>

<pallas_src>
import functools
import math

import jax
import jax.numpy as jnp
from jax.experimental import pallas as pl
from jax.experimental.pallas import tpu as pltpu

_NEG_BIG = -1e30  # finite "minus infinity" so exp() never sees NaN-producing -inf


def _sdpa_kernel(*refs, scale, causal, has_mask, skv, tq, tk, approx_recip):
    if has_mask:
        q_ref, k_ref, v_ref, mask_ref, o_ref, m_sc, l_sc, acc_sc = refs
    else:
        q_ref, k_ref, v_ref, o_ref, m_sc, l_sc, acc_sc = refs
        mask_ref = None

    qi = pl.program_id(1)
    kv = pl.program_id(2)

    @pl.when(kv == 0)
    def _init():
        m_sc[...] = jnp.full_like(m_sc, -jnp.inf)
        l_sc[...] = jnp.zeros_like(l_sc)
        acc_sc[...] = jnp.zeros_like(acc_sc)

    q = q_ref[0].astype(jnp.float32) * scale            # (tq, D)
    k = k_ref[0].astype(jnp.float32)                    # (tk, D)
    # scores: (tq, tk) on the MXU, contract the head dim of both (no transpose).
    s = jax.lax.dot_general(q, k, (((1,), (1,)), ((), ())),
                            preferred_element_type=jnp.float32)

    if mask_ref is not None:
        s = s + mask_ref[0].astype(jnp.float32)
        s = jnp.maximum(s, _NEG_BIG)                    # guard against -inf masks

    # Mask out-of-range KV columns (ragged tail) and, optionally, causal part.
    col = jax.lax.broadcasted_iota(jnp.int32, (tq, tk), 1) + kv * tk
    valid = col < skv
    if causal:
        row = jax.lax.broadcasted_iota(jnp.int32, (tq, tk), 0) + qi * tq
        valid = jnp.logical_and(valid, col <= row)
    s = jnp.where(valid, s, _NEG_BIG)

    # Online softmax update.
    m_prev = m_sc[...]                                   # (tq, 1)
    m_new = jnp.maximum(m_prev, jnp.max(s, axis=-1, keepdims=True))
    alpha = jnp.exp(m_prev - m_new)
    p = jnp.exp(s - m_new)                               # (tq, tk)
    l_sc[...] = alpha * l_sc[...] + jnp.sum(p, axis=-1, keepdims=True)

    vblk = v_ref[0]                                      # (tk, D)
    pv = jax.lax.dot_general(p.astype(vblk.dtype), vblk, (((1,), (0,)), ((), ())),
                             preferred_element_type=jnp.float32)
    acc_sc[...] = alpha * acc_sc[...] + pv
    m_sc[...] = m_new

    @pl.when(kv == pl.num_programs(2) - 1)
    def _finish():
        inv_l = pl.reciprocal(l_sc[...], approx=approx_recip)
        o_ref[0] = (acc_sc[...] * inv_l).astype(o_ref.dtype)


def _fused_sdpa_impl(query, key, value, attn_mask, dropout_p, is_causal, scale,
                     softmax_mode):
    if dropout_p != 0.0:
        # TODO(synk): dropout_p > 0 not implemented (would use pltpu.prng_seed /
        # pltpu.prng_random_bits inside the kernel).
        raise NotImplementedError("dropout_p > 0 is not supported")

    B, H, Sq, D = query.shape
    _, Hk, Skv, _ = key.shape
    if Hk != H:  # grouped-query attention: broadcast KV heads.
        key = jnp.repeat(key, H // Hk, axis=1)
        value = jnp.repeat(value, H // Hk, axis=1)

    if scale is None:
        scale = 1.0 / math.sqrt(D)

    q3 = query.reshape(B * H, Sq, D)
    k3 = key.reshape(B * H, Skv, D)
    v3 = value.reshape(B * H, Skv, D)

    has_mask = attn_mask is not None
    if has_mask:
        m = attn_mask
        if m.dtype == jnp.bool_:
            m = jnp.where(m, 0.0, _NEG_BIG)
        m = m.astype(jnp.float32)
        m = jnp.broadcast_to(m, (B, H, Sq, Skv)).reshape(B * H, Sq, Skv)

    # Tile selection: use the full (small) sequence when it fits, otherwise cap
    # at MXU/VMEM friendly sizes (tq multiple of 8, tk multiple of 128).
    tq = Sq if Sq <= 256 else 256
    tk = Skv if Skv <= 512 else 512
    n_q = pl.cdiv(Sq, tq)
    n_kv = pl.cdiv(Skv, tk)
    grid = (B * H, n_q, n_kv)

    itemsize = jnp.dtype(query.dtype).itemsize
    tile_bytes = (tq * D + 2 * tk * D + tq * D
                  + (tq * tk if has_mask else 0)) * itemsize
    est = 2 * tile_bytes + 4 * (tq * (D + 2)) + 4 * tq * tk  # 2x buffers + scratch
    vmem_limit = None
    if est > 24 * 1024 * 1024:
        vmem_limit = min(64 * 1024 * 1024, 2 * est)

    kernel = functools.partial(
        _sdpa_kernel,
        scale=float(scale),
        causal=bool(is_causal),
        has_mask=has_mask,
        skv=Skv,
        tq=tq,
        tk=tk,
        approx_recip=(str(softmax_mode).lower() == "fast"),
    )

    in_specs = [
        pl.BlockSpec((1, tq, D), lambda bh, qi, ki: (bh, qi, 0)),
        pl.BlockSpec((1, tk, D), lambda bh, qi, ki: (bh, ki, 0)),
        pl.BlockSpec((1, tk, D), lambda bh, qi, ki: (bh, ki, 0)),
    ]
    args = (q3, k3, v3)
    if has_mask:
        in_specs.append(pl.BlockSpec((1, tq, tk), lambda bh, qi, ki: (bh, qi, ki)))
        args = args + (m,)

    flops = 4 * B * H * Sq * Skv * D
    transcendentals = B * H * Sq * Skv
    bytes_accessed = (q3.size + k3.size + v3.size + q3.size) * itemsize
    if has_mask:
        bytes_accessed += m.size * 4
    cost = pl.CostEstimate(flops=flops, transcendentals=transcendentals,
                           bytes_accessed=bytes_accessed)

    out3 = pl.pallas_call(
        kernel,
        out_shape=jax.ShapeDtypeStruct((B * H, Sq, D), query.dtype),
        grid_spec=pltpu.PrefetchScalarGridSpec(
            num_scalar_prefetch=0,
            grid=grid,
            in_specs=in_specs,
            out_specs=pl.BlockSpec((1, tq, D), lambda bh, qi, ki: (bh, qi, 0)),
            scratch_shapes=[
                pltpu.VMEM((tq, 1), jnp.float32),   # running max
                pltpu.VMEM((tq, 1), jnp.float32),   # running denom
                pltpu.VMEM((tq, D), jnp.float32),   # output accumulator
            ],
        ),
        compiler_params=pltpu.CompilerParams(
            dimension_semantics=("parallel", "parallel", "arbitrary"),
            vmem_limit_bytes=vmem_limit,
        ),
        cost_estimate=cost,
    )(*args)

    return out3.reshape(B, H, Sq, D)


@functools.partial(
    jax.jit,
    static_argnames=("dropout_p", "is_causal", "scale", "softmax_mode"))
def fused_sdpa(query, key, value, attn_mask=None, dropout_p=0.0,
               is_causal=False, scale=None, softmax_mode="None"):
    return _fused_sdpa_impl(query, key, value, attn_mask, dropout_p, is_causal,
                            scale, softmax_mode)


class ModuleFusedSDPA:
    """JAX/Pallas counterpart of the Habana `ModuleFusedSDPA` wrapper."""

    def __init__(self, fusedSDPA=None):
        self._kernel = fused_sdpa  # fusedSDPA handle unused: kernel is built in.

    def __call__(self, query, key, value, attn_mask, dropout_p, is_casual,
                 scale, softmax_mode):
        return self._kernel(
            query, key, value,
            attn_mask=attn_mask,
            dropout_p=float(dropout_p),
            is_causal=bool(is_casual),
            scale=None if scale is None else float(scale),
            softmax_mode=softmax_mode,
        )


if __name__ == "__main__":
    key = jax.random.PRNGKey(0)
    B, H, S, D = 2, 4, 16, 32
    kq, kk, kv_, km = jax.random.split(key, 4)
    q = jax.random.normal(kq, (B, H, S, D), dtype=jnp.float32)
    k = jax.random.normal(kk, (B, H, S, D), dtype=jnp.float32)
    v = jax.random.normal(kv_, (B, H, S, D), dtype=jnp.float32)
    keep = jax.random.uniform(km, (B, 1, S, S)) > 0.2
    attn_mask = jnp.where(keep, 0.0, -1e9).astype(jnp.float32)

    mod = ModuleFusedSDPA(None)

    # Masked, non-causal, default softmax mode (exact reciprocal).
    out_masked = mod(q, k, v, attn_mask, 0.0, False, None, "None")
    # Causal, no mask, "fast" softmax mode (EUP approx reciprocal).
    out_causal = mod(q, k, v, None, 0.0, True, 1.0 / math.sqrt(D), "fast")
    out_masked, out_causal = jax.block_until_ready((out_masked, out_causal))

    def ref_sdpa(q, k, v, mask, is_causal, scale):
        s = jnp.einsum("bhqd,bhkd->bhqk", q, k) * scale
        if mask is not None:
            s = s + mask
        if is_causal:
            cm = jnp.tril(jnp.ones((s.shape[-2], s.shape[-1]), dtype=bool))
            s = jnp.where(cm, s, -1e30)
        p = jax.nn.softmax(s, axis=-1)
        return jnp.einsum("bhqk,bhkd->bhqd", p, v)

    scale = 1.0 / math.sqrt(D)
    ref_masked = ref_sdpa(q, k, v, attn_mask, False, scale)
    ref_causal = ref_sdpa(q, k, v, None, True, scale)

    assert out_masked.shape == q.shape and out_masked.dtype == q.dtype
    assert out_causal.shape == q.shape and out_causal.dtype == q.dtype
    assert jnp.allclose(out_masked, ref_masked, atol=2e-2, rtol=2e-2)
    assert jnp.allclose(out_causal, ref_causal, atol=2e-2, rtol=2e-2)

    print("KERNEL_OK")
</pallas_src>

<mosaic_0001>
module attributes {stable_mosaic.version = 11 : i64} {
  func.func @_sdpa_kernel(%arg0: i32, %arg1: i32, %arg2: i32, %arg3: memref<1x16x32xf32, #tpu.memory_space<vmem>>, %arg4: memref<1x16x32xf32, #tpu.memory_space<vmem>>, %arg5: memref<1x16x32xf32, #tpu.memory_space<vmem>>, %arg6: memref<1x16x16xf32, #tpu.memory_space<vmem>>, %arg7: memref<1x16x32xf32, #tpu.memory_space<vmem>>, %arg8: memref<16x1xf32, #tpu.memory_space<vmem>>, %arg9: memref<16x1xf32, #tpu.memory_space<vmem>>, %arg10: memref<16x32xf32, #tpu.memory_space<vmem>>) attributes {dimension_semantics = [#tpu.dimension_semantics<parallel>, #tpu.dimension_semantics<parallel>, #tpu.dimension_semantics<arbitrary>], iteration_bounds = array<i64: 8, 1, 1>, scalar_prefetch = 0 : i64, scratch_operands = 3 : i64, tpu.core_type = #tpu.core_type<tc>, window_params = [{transform_indices = @transform_0, window_bounds = array<i64: 1, 16, 32>}, {transform_indices = @transform_1, window_bounds = array<i64: 1, 16, 32>}, {transform_indices = @transform_2, window_bounds = array<i64: 1, 16, 32>}, {transform_indices = @transform_3, window_bounds = array<i64: 1, 16, 16>}, {transform_indices = @transform_4, window_bounds = array<i64: 1, 16, 32>}]} {
    %c0_i32 = arith.constant 0 : i32
    %0 = arith.cmpi eq, %arg2, %c0_i32 : i32
    %1 = arith.extui %0 : i1 to i32
    %c0_i32_0 = arith.constant 0 : i32
    %2 = arith.cmpi ne, %1, %c0_i32_0 : i32
    scf.if %2 {
      %cst_33 = arith.constant 0xFF800000 : f32
      %50 = vector.broadcast %cst_33 : f32 to vector<16x1xf32>
      %c0_34 = arith.constant 0 : index
      %c0_35 = arith.constant 0 : index
      %51 = vector.load %arg8[%c0_34, %c0_35] : memref<16x1xf32, #tpu.memory_space<vmem>>, vector<16x1xf32>
      tpu.vector_store %arg8[%c0_34, %c0_35], %50 {strides = array<i32>} : memref<16x1xf32, #tpu.memory_space<vmem>>, vector<16x1xf32>,
      %cst_36 = arith.constant 0.000000e+00 : f32
      %52 = vector.broadcast %cst_36 : f32 to vector<16x1xf32>
      %c0_37 = arith.constant 0 : index
      %c0_38 = arith.constant 0 : index
      %53 = vector.load %arg9[%c0_37, %c0_38] : memref<16x1xf32, #tpu.memory_space<vmem>>, vector<16x1xf32>
      tpu.vector_store %arg9[%c0_37, %c0_38], %52 {strides = array<i32>} : memref<16x1xf32, #tpu.memory_space<vmem>>, vector<16x1xf32>,
      %cst_39 = arith.constant 0.000000e+00 : f32
      %54 = vector.broadcast %cst_39 : f32 to vector<16x32xf32>
      %c0_40 = arith.constant 0 : index
      %c0_41 = arith.constant 0 : index
      %55 = vector.load %arg10[%c0_40, %c0_41] : memref<16x32xf32, #tpu.memory_space<vmem>>, vector<16x32xf32>
      tpu.vector_store %arg10[%c0_40, %c0_41], %54 {strides = array<i32>} : memref<16x32xf32, #tpu.memory_space<vmem>>, vector<16x32xf32>,
    } else {
    }
    %c0 = arith.constant 0 : index
    %c0_1 = arith.constant 0 : index
    %c0_2 = arith.constant 0 : index
    %3 = vector.load %arg3[%c0, %c0_1, %c0_2] : memref<1x16x32xf32, #tpu.memory_space<vmem>>, vector<1x16x32xf32>
    %4 = vector.shape_cast %3 : vector<1x16x32xf32> to vector<16x32xf32>
    %cst = arith.constant 0.176776692 : f32
    %5 = vector.broadcast %cst : f32 to vector<16x32xf32>
    %6 = arith.mulf %4, %5 : vector<16x32xf32>
    %c0_3 = arith.constant 0 : index
    %c0_4 = arith.constant 0 : index
    %c0_5 = arith.constant 0 : index
    %7 = vector.load %arg4[%c0_3, %c0_4, %c0_5] : memref<1x16x32xf32, #tpu.memory_space<vmem>>, vector<1x16x32xf32>
    %8 = vector.shape_cast %7 : vector<1x16x32xf32> to vector<16x32xf32>
    %cst_6 = arith.constant dense<0.000000e+00> : vector<16x16xf32>
    %9 = tpu.matmul %6, %8, %cst_6 {dimension_numbers = #tpu.dot_dimension_numbers<[1], [1], [0], [0], [0, 0, 1, 0], [], []>} : vector<16x32xf32>, vector<16x32xf32>, vector<16x16xf32> -> vector<16x16xf32>
    %c0_7 = arith.constant 0 : index
    %c0_8 = arith.constant 0 : index
    %c0_9 = arith.constant 0 : index
    %10 = vector.load %arg6[%c0_7, %c0_8, %c0_9] : memref<1x16x16xf32, #tpu.memory_space<vmem>>, vector<1x16x16xf32>
    %11 = vector.shape_cast %10 : vector<1x16x16xf32> to vector<16x16xf32>
    %12 = arith.addf %9, %11 : vector<16x16xf32>
    %cst_10 = arith.constant -1.000000e+30 : f32
    %13 = vector.broadcast %cst_10 : f32 to vector<16x16xf32>
    %14 = arith.maximumf %12, %13 : vector<16x16xf32>
    %15 = tpu.iota {dimensions = array<i32: 1>} : vector<16x16xi32>
    %c16_i32 = arith.constant 16 : i32
    %16 = arith.muli %arg2, %c16_i32 : i32
    %17 = vector.broadcast %16 : i32 to vector<16x16xi32>
    %18 = arith.addi %15, %17 : vector<16x16xi32>
    %c16_i32_11 = arith.constant 16 : i32
    %19 = vector.broadcast %c16_i32_11 : i32 to vector<16x16xi32>
    %20 = arith.cmpi slt, %18, %19 : vector<16x16xi32>
    %cst_12 = arith.constant -1.000000e+30 : f32
    %21 = vector.broadcast %cst_12 : f32 to vector<16x16xf32>
    %22 = arith.select %20, %14, %21 : vector<16x16xi1>, vector<16x16xf32>
    %c0_13 = arith.constant 0 : index
    %c0_14 = arith.constant 0 : index
    %23 = vector.load %arg8[%c0_13, %c0_14] : memref<16x1xf32, #tpu.memory_space<vmem>>, vector<16x1xf32>
    %cst_15 = arith.constant dense<0xFF800000> : vector<16xf32>
    %24 = vector.multi_reduction <maximumf>, %22, %cst_15 [1] : vector<16x16xf32> to vector<16xf32>
    %25 = vector.shape_cast %24 : vector<16xf32> to vector<16x1xf32>
    %26 = arith.maximumf %23, %25 : vector<16x1xf32>
    %27 = arith.subf %23, %26 : vector<16x1xf32>
    %28 = math.exp %27 : vector<16x1xf32>
    %29 = vector.broadcast %26 : vector<16x1xf32> to vector<16x16xf32>
    %30 = arith.subf %22, %29 : vector<16x16xf32>
    %31 = math.exp %30 : vector<16x16xf32>
    %c0_16 = arith.constant 0 : index
    %c0_17 = arith.constant 0 : index
    %32 = vector.load %arg9[%c0_16, %c0_17] : memref<16x1xf32, #tpu.memory_space<vmem>>, vector<16x1xf32>
    %33 = arith.mulf %28, %32 : vector<16x1xf32>
    %cst_18 = arith.constant dense<0.000000e+00> : vector<16xf32>
    %34 = vector.multi_reduction <add>, %31, %cst_18 [1] : vector<16x16xf32> to vector<16xf32>
    %35 = vector.shape_cast %34 : vector<16xf32> to vector<16x1xf32>
    %36 = arith.addf %33, %35 : vector<16x1xf32>
    %c0_19 = arith.constant 0 : index
    %c0_20 = arith.constant 0 : index
    %37 = vector.load %arg9[%c0_19, %c0_20] : memref<16x1xf32, #tpu.memory_space<vmem>>, vector<16x1xf32>
    tpu.vector_store %arg9[%c0_19, %c0_20], %36 {strides = array<i32>} : memref<16x1xf32, #tpu.memory_space<vmem>>, vector<16x1xf32>,
    %c0_21 = arith.constant 0 : index
    %c0_22 = arith.constant 0 : index
    %c0_23 = arith.constant 0 : index
    %38 = vector.load %arg5[%c0_21, %c0_22, %c0_23] : memref<1x16x32xf32, #tpu.memory_space<vmem>>, vector<1x16x32xf32>
    %39 = vector.shape_cast %38 : vector<1x16x32xf32> to vector<16x32xf32>
    %cst_24 = arith.constant dense<0.000000e+00> : vector<16x32xf32>
    %40 = tpu.matmul %31, %39, %cst_24 {dimension_numbers = #tpu.dot_dimension_numbers<[1], [0], [0], [1], [0, 0, 1, 1], [], []>} : vector<16x16xf32>, vector<16x32xf32>, vector<16x32xf32> -> vector<16x32xf32>
    %c0_25 = arith.constant 0 : index
    %c0_26 = arith.constant 0 : index
    %41 = vector.load %arg10[%c0_25, %c0_26] : memref<16x32xf32, #tpu.memory_space<vmem>>, vector<16x32xf32>
    %42 = vector.broadcast %28 : vector<16x1xf32> to vector<16x32xf32>
    %43 = arith.mulf %42, %41 : vector<16x32xf32>
    %44 = arith.addf %43, %40 : vector<16x32xf32>
    %c0_27 = arith.constant 0 : index
    %c0_28 = arith.constant 0 : index
    %45 = vector.load %arg10[%c0_27, %c0_28] : memref<16x32xf32, #tpu.memory_space<vmem>>, vector<16x32xf32>
    tpu.vector_store %arg10[%c0_27, %c0_28], %44 {strides = array<i32>} : memref<16x32xf32, #tpu.memory_space<vmem>>, vector<16x32xf32>,
    %c0_29 = arith.constant 0 : index
    %c0_30 = arith.constant 0 : index
    %46 = vector.load %arg8[%c0_29, %c0_30] : memref<16x1xf32, #tpu.memory_space<vmem>>, vector<16x1xf32>
    tpu.vector_store %arg8[%c0_29, %c0_30], %26 {strides = array<i32>} : memref<16x1xf32, #tpu.memory_space<vmem>>, vector<16x1xf32>,
    %c0_i32_31 = arith.constant 0 : i32
    %47 = arith.cmpi eq, %arg2, %c0_i32_31 : i32
    %48 = arith.extui %47 : i1 to i32
    %c0_i32_32 = arith.constant 0 : i32
    %49 = arith.cmpi ne, %48, %c0_i32_32 : i32
    scf.if %49 {
      %c0_33 = arith.constant 0 : index
      %c0_34 = arith.constant 0 : index
      %50 = vector.load %arg9[%c0_33, %c0_34] : memref<16x1xf32, #tpu.memory_space<vmem>>, vector<16x1xf32>
      %51 = tpu.reciprocal %50 : vector<16x1xf32> -> vector<16x1xf32>
      %c0_35 = arith.constant 0 : index
      %c0_36 = arith.constant 0 : index
      %52 = vector.load %arg10[%c0_35, %c0_36] : memref<16x32xf32, #tpu.memory_space<vmem>>, vector<16x32xf32>
      %53 = vector.broadcast %51 : vector<16x1xf32> to vector<16x32xf32>
      %54 = arith.mulf %52, %53 : vector<16x32xf32>
      %c0_37 = arith.constant 0 : index
      %c0_38 = arith.constant 0 : index
      %c0_39 = arith.constant 0 : index
      %55 = vector.load %arg7[%c0_37, %c0_38, %c0_39] : memref<1x16x32xf32, #tpu.memory_space<vmem>>, vector<1x16x32xf32>
      %56 = vector.shape_cast %55 : vector<1x16x32xf32> to vector<16x32xf32>
      %57 = vector.shape_cast %54 : vector<16x32xf32> to vector<1x16x32xf32>
      tpu.vector_store %arg7[%c0_37, %c0_38, %c0_39], %57 {strides = array<i32>} : memref<1x16x32xf32, #tpu.memory_space<vmem>>, vector<1x16x32xf32>,
    } else {
    }
    return
  }
  func.func @transform_0(%arg0: i32, %arg1: i32, %arg2: i32) -> (i32, i32, i32) {
    %c0_i32 = arith.constant 0 : i32
    %c0_i32_0 = arith.constant 0 : i32
    return %arg0, %arg1, %c0_i32 : i32, i32, i32
  }
  func.func @transform_1(%arg0: i32, %arg1: i32, %arg2: i32) -> (i32, i32, i32) {
    %c0_i32 = arith.constant 0 : i32
    %c0_i32_0 = arith.constant 0 : i32
    return %arg0, %arg2, %c0_i32 : i32, i32, i32
  }
  func.func @transform_2(%arg0: i32, %arg1: i32, %arg2: i32) -> (i32, i32, i32) {
    %c0_i32 = arith.constant 0 : i32
    %c0_i32_0 = arith.constant 0 : i32
    return %arg0, %arg2, %c0_i32 : i32, i32, i32
  }
  func.func @transform_3(%arg0: i32, %arg1: i32, %arg2: i32) -> (i32, i32, i32) {
    %c0_i32 = arith.constant 0 : i32
    return %arg0, %arg1, %arg2 : i32, i32, i32
  }
  func.func @transform_4(%arg0: i32, %arg1: i32, %arg2: i32) -> (i32, i32, i32) {
    %c0_i32 = arith.constant 0 : i32
    %c0_i32_0 = arith.constant 0 : i32
    return %arg0, %arg1, %c0_i32 : i32, i32, i32
  }
}

</mosaic_0001>

<llo_original>
// kernel: fused_sdpa.1
$region0: #{fused_sdpa.1}
  #allocation0 [shape = 'u32[]', space=smem, size = 0x4, offset = 0x4, fixed_abs, tag = 'smem constant byte address 0x4 - core index']
  #allocation1 [shape = 'u32[144,128]{1,0:T(1,128)}', space=vmem, size = 0x12000, scoped, tag = 'internal scratch']
  #allocation2 [shape = 'f32[16,1]{1,0:T(8,128)}', space=vmem, size = 0x2000, scoped, tag = 'scratch operand']
  #allocation3 [shape = 'f32[16,1]{1,0:T(8,128)}', space=vmem, size = 0x2000, scoped, tag = 'scratch operand']
  #allocation4 [shape = 'f32[16,32]{1,0:T(8,128)}', space=vmem, size = 0x2000, scoped, tag = 'scratch operand']
  %s0 = inlined_call_operand.vmem [shape: f32[8,16,32], index: 0, kind: input, shape index: {}]
  %s1 = inlined_call_operand.hbm [shape: f32[8,16,32], index: 1, kind: input, shape index: {}]
  %s2 = inlined_call_operand.hbm [shape: f32[8,16,32], index: 2, kind: input, shape index: {}]
  %s3 = inlined_call_operand.vmem [shape: f32[8,16,16], index: 3, kind: input, shape index: {}]
  %s4 = inlined_call_operand.hbm [shape: f32[8,16,32], index: 4, kind: output, shape index: {}]
  %s5 = sld [smem:[#allocation0]]
  $region65: #{fused_sdpa.1} parent=0
    _
  %s7 = ssub.s32 1, %s5
  %s8 = scalar_select 0, %s7, %s5
  $region1: #{fused_sdpa.1} parent=0
    #allocation5 [shape = 'u8[16384]{0}', space=vmem, size = 0x4000, scoped, tag = 'input window, operand 1']
    #allocation6 [shape = 's32[2]{0}', space=sflag, size = 0x8, scoped, tag = 'scoped memory for fused_sdpa.1']
    #allocation7 [shape = 's32[2]{0}', space=sflag, size = 0x8, scoped, tag = 'scoped memory for fused_sdpa.1']
    #allocation8 [shape = 'u8[16384]{0}', space=vmem, size = 0x4000, scoped, tag = 'input window, operand 2']
    #allocation9 [shape = 's32[2]{0}', space=sflag, size = 0x8, scoped, tag = 'scoped memory for fused_sdpa.1']
    #allocation10 [shape = 'u8[16384]{0}', space=vmem, size = 0x4000, scoped, tag = 'output window, operand 0']
    %9 = vsyncpa [#allocation6], 0
    %s10 = scalar_lea.sflag [#allocation6], 1
    %11 = vsyncpa %s10, 0
    %12 = vsyncpa [#allocation9], 0
    %s13 = scalar_lea.sflag [#allocation9], 1
    %14 = vsyncpa %s13, 0
    %15 = vsyncpa [#allocation7], 0
    %s16 = scalar_lea.sflag [#allocation7], 1
    %17 = vsyncpa %s16, 0
    loop: start=0, step=1, limit=10
    $region2: #{fused_sdpa.1} parent=1 // loop_pre_header
      _
    $region3: #{fused_sdpa.1} parent=1 // loop_header
      %s19 = sphi 0, %s23
      %p20 = scmp.ge.s32.totalorder %s19, 10
      %s26 = sphi 0, %s45
      %s27 = sphi 0, %s41
      %s28 = sphi 0, %s37
      %s29 = sphi 0, %s26
      %s30 = sphi 0, %s27
      %s31 = sphi 0, %s28
      %s32 = sphi 0, %s29
      %s33 = sphi 0, %s30
      %s34 = sphi 0, %s31
      %s50 = sphi 0, %s52
      %s53 = sphi 0, %s50
      %s54 = sphi 0, %s53
      %s70 = sphi 0, %s54
      %s78 = sphi 0, %s80
      %s81 = sphi 0, %s78
      %s82 = sphi 0, %s81
      %s98 = sphi 0, %s82
      %s106 = sphi 0, %s108
      %s109 = sphi 0, %s106
      %s110 = sphi 0, %s109
      %s126 = sphi 0, %s110
      %s136 = sphi 0, %s138
      %s139 = sphi 0, %s136
      %s140 = sphi 0, %s139
      %s156 = sphi 0, %s140
      %s164 = sphi 0, %s166
      %s167 = sphi 0, %s164
      %s168 = sphi 0, %s167
      %s184 = sphi 0, %s168
    $region4: #{fused_sdpa.1} parent=1 // loop_header_branch
      %22 = sbr.rel (%p20) target = $region8
    $region5: #{fused_sdpa.1} parent=1 // loop_body
      %s24 = ssub.s32 %s19, 1
      %s25 = ssub.s32 %s19, 2
      %s35 = sadd.s32 1, %s28
      %p36 = scmp.ge.s32.totalorder %s35, 1
      %s37 = scalar_select %p36, 0, %s35
      %s38 = sadd.s32 1, %s27
      %s39 = scalar_select %p36, %s38, %s27
      %p40 = scmp.ge.s32.totalorder %s39, 1
      %s41 = scalar_select %p40, 0, %s39
      %s42 = sadd.s32 1, %s26
      %s43 = scalar_select %p40, %s42, %s26
      %p44 = scmp.ge.s32.totalorder %s43, 8
      %s45 = scalar_select %p44, 0, %s43
      %s46 = ssub.s32 %s26, %s45
      %s47 = ssub.s32 %s27, %s41
      %s48 = sor.u32 %s46, %s47
      %p49 = scmp.eq.s32.totalorder %s48, 0
      %s51 = sadd.s32 %s50, 1
      %s52 = scalar_select %p49, %s50, %s51
      %p55 = pneg %p49
      %p56 = scmp.eq.s32.totalorder %s19, 7
      %p57 = por %p55, %p56
      %p58 = scmp.ne.s32.totalorder %s50, %s53
      %p59 = scmp.eq.s32.totalorder %s19, 0
      %p60 = por %p58, %p59
      %p61 = scmp.ne.s32.totalorder %s50, %s53
      %p62 = scmp.eq.s32.totalorder %s24, 7
      %p63 = por %p61, %p62
      %p64 = scmp.ne.s32.totalorder %s53, %s54
      %p65 = scmp.eq.s32.totalorder %s24, 0
      %p66 = por %p64, %p65
      %p67 = scmp.ne.s32.totalorder %s53, %s54
      %p68 = scmp.eq.s32.totalorder %s25, 7
      %p69 = por %p67, %p68
      %p71 = scmp.ne.s32.totalorder %s54, %s70
      %p72 = scmp.eq.s32.totalorder %s25, 0
      %p73 = por %p71, %p72
      %s74 = ssub.s32 %s26, %s45
      %s75 = ssub.s32 %s28, %s37
      %s76 = sor.u32 %s74, %s75
      %p77 = scmp.eq.s32.totalorder %s76, 0
      %s79 = sadd.s32 %s78, 1
      %s80 = scalar_select %p77, %s78, %s79
      %p83 = pneg %p77
      %p84 = scmp.eq.s32.totalorder %s19, 7
      %p85 = por %p83, %p84
      %p86 = scmp.ne.s32.totalorder %s78, %s81
      %p87 = scmp.eq.s32.totalorder %s19, 0
      %p88 = por %p86, %p87
      %p89 = scmp.ne.s32.totalorder %s78, %s81
      %p90 = scmp.eq.s32.totalorder %s24, 7
      %p91 = por %p89, %p90
      %p92 = scmp.ne.s32.totalorder %s81, %s82
      %p93 = scmp.eq.s32.totalorder %s24, 0
      %p94 = por %p92, %p93
      %p95 = scmp.ne.s32.totalorder %s81, %s82
      %p96 = scmp.eq.s32.totalorder %s25, 7
      %p97 = por %p95, %p96
      %p99 = scmp.ne.s32.totalorder %s82, %s98
      %p100 = scmp.eq.s32.totalorder %s25, 0
      %p101 = por %p99, %p100
      %s102 = ssub.s32 %s26, %s45
      %s103 = ssub.s32 %s28, %s37
      %s104 = sor.u32 %s102, %s103
      %p105 = scmp.eq.s32.totalorder %s104, 0
      %s107 = sadd.s32 %s106, 1
      %s108 = scalar_select %p105, %s106, %s107
      %p111 = pneg %p105
      %p112 = scmp.eq.s32.totalorder %s19, 7
      %p113 = por %p111, %p112
      %p114 = scmp.ne.s32.totalorder %s106, %s109
      %p115 = scmp.eq.s32.totalorder %s19, 0
      %p116 = por %p114, %p115
      %p117 = scmp.ne.s32.totalorder %s106, %s109
      %p118 = scmp.eq.s32.totalorder %s24, 7
      %p119 = por %p117, %p118
      %p120 = scmp.ne.s32.totalorder %s109, %s110
      %p121 = scmp.eq.s32.totalorder %s24, 0
      %p122 = por %p120, %p121
      %p123 = scmp.ne.s32.totalorder %s109, %s110
      %p124 = scmp.eq.s32.totalorder %s25, 7
      %p125 = por %p123, %p124
      %p127 = scmp.ne.s32.totalorder %s110, %s126
      %p128 = scmp.eq.s32.totalorder %s25, 0
      %p129 = por %p127, %p128
      %s130 = ssub.s32 %s26, %s45
      %s131 = ssub.s32 %s27, %s41
      %s132 = sor.u32 %s130, %s131
      %s133 = ssub.s32 %s28, %s37
      %s134 = sor.u32 %s132, %s133
      %p135 = scmp.eq.s32.totalorder %s134, 0
      %s137 = sadd.s32 %s136, 1
      %s138 = scalar_select %p135, %s136, %s137
      %p141 = pneg %p135
      %p142 = scmp.eq.s32.totalorder %s19, 7
      %p143 = por %p141, %p142
      %p144 = scmp.ne.s32.totalorder %s136, %s139
      %p145 = scmp.eq.s32.totalorder %s19, 0
      %p146 = por %p144, %p145
      %p147 = scmp.ne.s32.totalorder %s136, %s139
      %p148 = scmp.eq.s32.totalorder %s24, 7
      %p149 = por %p147, %p148
      %p150 = scmp.ne.s32.totalorder %s139, %s140
      %p151 = scmp.eq.s32.totalorder %s24, 0
      %p152 = por %p150, %p151
      %p153 = scmp.ne.s32.totalorder %s139, %s140
      %p154 = scmp.eq.s32.totalorder %s25, 7
      %p155 = por %p153, %p154
      %p157 = scmp.ne.s32.totalorder %s140, %s156
      %p158 = scmp.eq.s32.totalorder %s25, 0
      %p159 = por %p157, %p158
      %s160 = ssub.s32 %s26, %s45
      %s161 = ssub.s32 %s27, %s41
      %s162 = sor.u32 %s160, %s161
      %p163 = scmp.eq.s32.totalorder %s162, 0
      %s165 = sadd.s32 %s164, 1
      %s166 = scalar_select %p163, %s164, %s165
      %p169 = pneg %p163
      %p170 = scmp.eq.s32.totalorder %s19, 7
      %p171 = por %p169, %p170
      %p172 = scmp.ne.s32.totalorder %s164, %s167
      %p173 = scmp.eq.s32.totalorder %s19, 0
      %p174 = por %p172, %p173
      %p175 = scmp.ne.s32.totalorder %s164, %s167
      %p176 = scmp.eq.s32.totalorder %s24, 7
      %p177 = por %p175, %p176
      %p178 = scmp.ne.s32.totalorder %s167, %s168
      %p179 = scmp.eq.s32.totalorder %s24, 0
      %p180 = por %p178, %p179
      %p181 = scmp.ne.s32.totalorder %s167, %s168
      %p182 = scmp.eq.s32.totalorder %s25, 7
      %p183 = por %p181, %p182
      %p185 = scmp.ne.s32.totalorder %s168, %s184
      %p186 = scmp.eq.s32.totalorder %s25, 0
      %p187 = por %p185, %p186
      %p188 = scmp.le.s32.totalorder 1, %s19
      %p189 = scmp.lt.s32.totalorder %s19, 9
      %p190 = pnand %p188, %p189
      %p191 = pneg %p190
      // Predicated region
      $region9: #{fused_sdpa.1} parent=5 // pred_check
        _
      $region10: #{fused_sdpa.1} parent=5 // pred_check_branch
        %193 = sbr.rel (%p190) target = $region12
      $region11: #{fused_sdpa.1} parent=5 // pred_region
        %s194 = ssub.s32 %s19, 1
      $region12: #{fused_sdpa.1} parent=5 // pred_fallthru
        _
      %p195 = scmp.lt.s32.totalorder %s19, 8
      // Predicated region
      $region13: #{fused_sdpa.1} parent=5 // pred_check
        %p196 = pneg %p195
      $region14: #{fused_sdpa.1} parent=5 // pred_check_branch
        %198 = sbr.rel (%p196) target = $region16
      $region15: #{fused_sdpa.1} parent=5 // pred_region
        // Predicated region
        $region17: #{fused_sdpa.1} parent=15 // pred_check
          %p199 = pneg %p60
        $region18: #{fused_sdpa.1} parent=15 // pred_check_branch
          %201 = sbr.rel (%p199) target = $region20
        $region19: #{fused_sdpa.1} parent=15 // pred_region
          %s202 = smul.u32 2, %s27
          %p203 = scmp.lt.s32.totalorder %s26, 7
          %s204 = scalar_select %p203, %s26, 7
          %p205 = scmp.lt.s32.totalorder %s202, 1
          %s206 = scalar_select %p205, %s202, 1
          %s207 = smul.addr %s204, 2
          %s208 = sadd.s32 %s206, %s207
          %s209 = smul.addr %s208, 8
          %s210 = scalar_lea.vmem %s0, %s209
          %s211 = smul.u32 2, %s27
        $region20: #{fused_sdpa.1} parent=15 // pred_fallthru
          _
        // Predicated region
        $region21: #{fused_sdpa.1} parent=15 // pred_check
          %p212 = pneg %p88
        $region22: #{fused_sdpa.1} parent=15 // pred_check_branch
          %214 = sbr.rel (%p212) target = $region24
        $region23: #{fused_sdpa.1} parent=15 // pred_region
          %s215 = sand.u32 %s78, 1
          %s216 = scalar_lea.sflag [#allocation6], %s215
          %s217 = sand.u32 %s78, 1
          %s218 = smul.addr %s217, 16
          %s219 = scalar_lea.vmem [#allocation5], %s218
          %s220 = smul.u32 2, %s28
          %s222 = ssub.s32 256, 256
          %223 = vsyncadd %s216, %s222
          %s224 = smul.addr %s26, 2
          %s225 = sadd.s32 %s220, %s224
          %s226 = smul.addr %s225, 128
          %s227 = scalar_lea.hbm %s1, %s226
          %s228 = sshll.u32 %s219, 4
          %s229 = int_to_ptr.vmem [resolvable:$true] %s228
          %234 = dma.hbm_to_vmem [thread:$0]  %s227, 256, %s229, %s216, 128, 128, 8
        $region24: #{fused_sdpa.1} parent=15 // pred_fallthru
          _
        // Predicated region
        $region25: #{fused_sdpa.1} parent=15 // pred_check
          %p235 = pneg %p116
        $region26: #{fused_sdpa.1} parent=15 // pred_check_branch
          %237 = sbr.rel (%p235) target = $region28
        $region27: #{fused_sdpa.1} parent=15 // pred_region
          %s238 = sand.u32 %s106, 1
          %s239 = scalar_lea.sflag [#allocation9], %s238
          %s240 = sand.u32 %s106, 1
          %s241 = smul.addr %s240, 16
          %s242 = scalar_lea.vmem [#allocation8], %s241
          %s243 = smul.u32 2, %s28
          %s245 = ssub.s32 256, 256
          %246 = vsyncadd %s239, %s245
          %s247 = smul.addr %s26, 2
          %s248 = sadd.s32 %s243, %s247
          %s249 = smul.addr %s248, 128
          %s250 = scalar_lea.hbm %s2, %s249
          %s251 = sshll.u32 %s242, 4
          %s252 = int_to_ptr.vmem [resolvable:$true] %s251
          %257 = dma.hbm_to_vmem [thread:$0]  %s250, 256, %s252, %s239, 128, 128, 8
        $region28: #{fused_sdpa.1} parent=15 // pred_fallthru
          _
        // Predicated region
        $region29: #{fused_sdpa.1} parent=15 // pred_check
          %p258 = pneg %p146
        $region30: #{fused_sdpa.1} parent=15 // pred_check_branch
          %260 = sbr.rel (%p258) target = $region32
        $region31: #{fused_sdpa.1} parent=15 // pred_region
          %s261 = smul.u32 2, %s27
          %p262 = scmp.lt.s32.totalorder %s26, 7
          %s263 = scalar_select %p262, %s26, 7
          %p264 = scmp.lt.s32.totalorder %s261, 1
          %s265 = scalar_select %p264, %s261, 1
          %p266 = scmp.lt.s32.totalorder %s28, 0
          %s267 = scalar_select %p266, %s28, 0
          %s268 = sadd.s32 %s267, %s265
          %s269 = smul.addr %s263, 2
          %s270 = sadd.s32 %s268, %s269
          %s271 = smul.addr %s270, 8
          %s272 = scalar_lea.vmem %s3, %s271
          %s273 = smul.u32 2, %s27
        $region32: #{fused_sdpa.1} parent=15 // pred_fallthru
          _
      $region16: #{fused_sdpa.1} parent=5 // pred_fallthru
        _
      %p274 = scmp.le.s32.totalorder 1, %s19
      %p275 = scmp.lt.s32.totalorder %s19, 9
      %p276 = pnand %p274, %p275
      %p277 = pneg %p276
      // Predicated region
      $region33: #{fused_sdpa.1} parent=5 // pred_check
        _
      $region34: #{fused_sdpa.1} parent=5 // pred_check_branch
        %279 = sbr.rel (%p276) target = $region36
      $region35: #{fused_sdpa.1} parent=5 // pred_region
        %s280 = ssub.s32 %s19, 1
        %s281 = sand.u32 %s81, 1
        %s282 = scalar_lea.sflag [#allocation6], %s281
        %s283 = sand.u32 %s81, 1
        %s284 = smul.addr %s283, 16
        %s285 = scalar_lea.vmem [#allocation5], %s284
        // Predicated region
        $region37: #{fused_sdpa.1} parent=35 // pred_check
          %p286 = pneg %p94
        $region38: #{fused_sdpa.1} parent=35 // pred_check_branch
          %288 = sbr.rel (%p286) target = $region40
        $region39: #{fused_sdpa.1} parent=35 // pred_region
          %289 = dma.done %s282, 256
        $region40: #{fused_sdpa.1} parent=35 // pred_fallthru
          _
        %s290 = sand.u32 %s109, 1
        %s291 = scalar_lea.sflag [#allocation9], %s290
        %s292 = sand.u32 %s109, 1
        %s293 = smul.addr %s292, 16
        %s294 = scalar_lea.vmem [#allocation8], %s293
        // Predicated region
        $region41: #{fused_sdpa.1} parent=35 // pred_check
          %p295 = pneg %p122
        $region42: #{fused_sdpa.1} parent=35 // pred_check_branch
          %297 = sbr.rel (%p295) target = $region44
        $region43: #{fused_sdpa.1} parent=35 // pred_region
          %298 = dma.done %s291, 256
        $region44: #{fused_sdpa.1} parent=35 // pred_fallthru
          _
        %s299 = smul.u32 2, %s30
        %p300 = scmp.lt.s32.totalorder %s29, 7
        %s301 = scalar_select %p300, %s29, 7
        %p302 = scmp.lt.s32.totalorder %s299, 1
        %s303 = scalar_select %p302, %s299, 1
        %s304 = smul.addr %s301, 2
        %s305 = sadd.s32 %s303, %s304
        %s306 = smul.addr %s305, 8
        %s307 = scalar_lea.vmem %s0, %s306
        %p308 = pneg %p66
        %p309 = pneg %p63
        %s310 = sand.u32 %s81, 1
        %s311 = scalar_lea.sflag [#allocation6], %s310
        %s312 = sand.u32 %s81, 1
        %s313 = smul.addr %s312, 16
        %s314 = scalar_lea.vmem [#allocation5], %s313
        %p315 = pneg %p94
        %p316 = pneg %p91
        %s317 = sand.u32 %s109, 1
        %s318 = scalar_lea.sflag [#allocation9], %s317
        %s319 = sand.u32 %s109, 1
        %s320 = smul.addr %s319, 16
        %s321 = scalar_lea.vmem [#allocation8], %s320
        %p322 = pneg %p122
        %p323 = pneg %p119
        %s324 = smul.u32 2, %s30
        %p325 = scmp.lt.s32.totalorder %s29, 7
        %s326 = scalar_select %p325, %s29, 7
        %p327 = scmp.lt.s32.totalorder %s324, 1
        %s328 = scalar_select %p327, %s324, 1
        %p329 = scmp.lt.s32.totalorder %s31, 0
        %s330 = scalar_select %p329, %s31, 0
        %s331 = sadd.s32 %s330, %s328
        %s332 = smul.addr %s326, 2
        %s333 = sadd.s32 %s331, %s332
        %s334 = smul.addr %s333, 8
        %s335 = scalar_lea.vmem %s3, %s334
        %p336 = pneg %p152
        %p337 = pneg %p149
        %p338 = pneg %p180
        %p339 = pneg %p177
        %s340 = sand.u32 %s167, 1
        %s341 = scalar_lea.sflag [#allocation7], %s340
        %s342 = sand.u32 %s167, 1
        %s343 = smul.addr %s342, 16
        %s344 = scalar_lea.vmem [#allocation10], %s343
        %s345 = smul.u32 2, %s30
        %p346 = scmp.lt.s32.totalorder %s29, 7
        %s347 = scalar_select %p346, %s29, 7
        %p348 = scmp.lt.s32.totalorder %s345, 1
        %s349 = scalar_select %p348, %s345, 1
        %s350 = smul.addr %s347, 2
        %s351 = sadd.s32 %s349, %s350
        %s352 = smul.addr %s351, 8
        %s353 = scalar_lea.vmem %s0, %s352
        %s354 = smul.u32 2, %s30
        %s355 = smul.u32 2, %s31
        %s356 = smul.u32 2, %s31
        %s357 = smul.u32 2, %s30
        %p358 = scmp.lt.s32.totalorder %s29, 7
        %s359 = scalar_select %p358, %s29, 7
        %p360 = scmp.lt.s32.totalorder %s357, 1
        %s361 = scalar_select %p360, %s357, 1
        %p362 = scmp.lt.s32.totalorder %s31, 0
        %s363 = scalar_select %p362, %s31, 0
        %s364 = sadd.s32 %s363, %s361
        %s365 = smul.addr %s359, 2
        %s366 = sadd.s32 %s364, %s365
        %s367 = smul.addr %s366, 8
        %s368 = scalar_lea.vmem %s3, %s367
        %s369 = smul.u32 2, %s30
        %s370 = smul.u32 2, %s30
        %p371 = scmp.eq.s32.totalorder %s31, 0
        // Predicated region
        $region45: #{fused_sdpa.1} parent=35 // pred_check
          %p372 = pneg %p371
        $region46: #{fused_sdpa.1} parent=35 // pred_check_branch
          %374 = sbr.rel (%p372) target = $region48
        $region47: #{fused_sdpa.1} parent=35 // pred_region
          %vm375 = vcmask 7168
          %376 = vst.msk [vmem:[#allocation2] sm:$0xff] %vm375, -inf
          %377 = vst.msk [vmem:[#allocation2 + $0x8] sm:$0xff] %vm375, -inf
          %378 = vst.msk [vmem:[#allocation3] sm:$0xff] %vm375, 0.0
          %379 = vst.msk [vmem:[#allocation3 + $0x8] sm:$0xff] %vm375, 0.0
          %vm380 = vcmask 261120
          %381 = vst.msk [vmem:[#allocation4] sm:$0xff] %vm380, 0.0
          %382 = vst.msk [vmem:[#allocation4 + $0x8] sm:$0xff] %vm380, 0.0
        $region48: #{fused_sdpa.1} parent=35 // pred_fallthru
          _
        %v383 = vld [vmem:[%s353] sm:$0xff]
        %v384 = vld [vmem:[%s353 + $0x8] sm:$0xff]
        %v385 = vmul.f32 %v383, 0.17677669
        %v386 = vmul.f32 %v384, 0.17677669
        %v387 = vld [vmem:[%s285] sm:$0xff]
        %v388 = vld [vmem:[%s285 + $0x8] sm:$0xff]
        %v389 = vld [vmem:[%s368] sm:$0xff]
        %v390 = vld [vmem:[%s368 + $0x8] sm:$0xff]
        %vm391 = vcmask 261120
        %v393 = vsel %vm391, %v385, 0
        %v396 = vsel %vm391, %v386, 0
        %v399 = vsel %vm391, %v387, 0
        %v402 = vsel %vm391, %v388, 0
        %404 = vmatprep.subr.mxu0 0.0
        %405 = vmatpush1.xpose.msra.mxu0 0.0
        %406 = vmatprep.subr.mxu0 0.0
        %407 = vmatpush1.xpose.msra.mxu0 0.0
        %408 = vmatprep.subr.mxu0 0.0
        %409 = vmatpush1.xpose.msra.mxu0 0.0
        %410 = vmatprep.subr.mxu0 0.0
        %411 = vmatpush1.xpose.msra.mxu0 0.0
        %412 = vmatprep.subr.mxu0 0.0
        %413 = vmatpush1.xpose.msra.mxu0 0.0
        %414 = vmatprep.subr.mxu0 0.0
        %415 = vmatpush1.xpose.msra.mxu0 0.0
        %416 = vmatprep.subr.mxu0 0.0
        %417 = vmatpush1.xpose.msra.mxu0 0.0
        %418 = vmatprep.subr.mxu0 0.0
        %419 = vmatpush1.xpose.msra.mxu0 0.0
        %420 = vmatprep.subr.mxu0 0.0
        %421 = vmatpush1.xpose.msra.mxu0 0.0
        %422 = vmatprep.subr.mxu0 0.0
        %423 = vmatpush1.xpose.msra.mxu0 0.0
        %424 = vmatprep.subr.mxu0 0.0
        %425 = vmatpush1.xpose.msra.mxu0 0.0
        %426 = vmatprep.subr.mxu0 0.0
        %427 = vmatpush1.xpose.msra.mxu0 0.0
        %428 = vmatprep.subr.mxu0 0.0
        %429 = vmatpush1.xpose.msra.mxu0 0.0
        %430 = vmatprep.subr.mxu0 0.0
        %431 = vmatpush1.xpose.msra.mxu0 0.0
        %432 = vmatprep.subr.mxu0 0.0
        %433 = vmatpush1.xpose.msra.mxu0 %v402
        %434 = vmatprep.subr.mxu0 0.0
        %435 = vmatpush1.xpose.msra.mxu0 %v399
        %436 = vmatprep.subr.mxu0 0.0
        %437 = vmatpush2.xpose.msra.mxu0 0.0
        %438 = vmatprep.subr.mxu0 0.0
        %439 = vmatpush2.xpose.msra.mxu0 0.0
        %440 = vmatprep.subr.mxu0 0.0
        %441 = vmatpush2.xpose.msra.mxu0 0.0
        %442 = vmatprep.subr.mxu0 0.0
        %443 = vmatpush2.xpose.msra.mxu0 0.0
        %444 = vmatprep.subr.mxu0 0.0
        %445 = vmatpush2.xpose.msra.mxu0 0.0
        %446 = vmatprep.subr.mxu0 0.0
        %447 = vmatpush2.xpose.msra.mxu0 0.0
        %448 = vmatprep.subr.mxu0 0.0
        %449 = vmatpush2.xpose.msra.mxu0 0.0
        %450 = vmatprep.subr.mxu0 0.0
        %451 = vmatpush2.xpose.msra.mxu0 0.0
        %452 = vmatprep.subr.mxu0 0.0
        %453 = vmatpush2.xpose.msra.mxu0 0.0
        %454 = vmatprep.subr.mxu0 0.0
        %455 = vmatpush2.xpose.msra.mxu0 0.0
        %456 = vmatprep.subr.mxu0 0.0
        %457 = vmatpush2.xpose.msra.mxu0 0.0
        %458 = vmatprep.subr.mxu0 0.0
        %459 = vmatpush2.xpose.msra.mxu0 0.0
        %460 = vmatprep.subr.mxu0 0.0
        %461 = vmatpush2.xpose.msra.mxu0 0.0
        %462 = vmatprep.subr.mxu0 0.0
        %463 = vmatpush2.xpose.msra.mxu0 0.0
        %464 = vmatprep.subr.mxu0 0.0
        %465 = vmatpush2.xpose.msra.mxu0 0.0
        %466 = vmatprep.subr.mxu0 0.0
        %467 = vmatpush2.xpose.msra.mxu0 0.0
        %468 = vmatprep.mubr.f32.mxu0 0.0
        %469 = vmatmul.mubr.f32.gmra.mxu0 %v393
        %v470 = vpop.f32.mrf.mxu0
        %v471 = vadd.f32 %v389, %v470
        %v472 = vpop.f32.mrf.mxu0
        %473 = vmatprep.mubr.f32.mxu0 0.0
        %474 = vmatmul.mubr.f32.gmra.mxu0 %v396
        %v475 = vpop.f32.mrf.mxu0
        %v476 = vadd.f32 %v390, %v475
        %v477 = vpop.f32.mrf.mxu0
        %478 = vdwg.mxu0
        %v479 = vmax.f32 %v471, -1e+30
        %v480 = vmax.f32 %v476, -1e+30
        %v481 = vlaneseq
        %v482 = vand.u32 %v481, 127
        %s483 = smul.u32 %s31, 16
        %v484 = vstv %s483
        %v485 = vadd.s32 %v482, %v484
        %vm486 = vcmp.lt.s32.totalorder %v485, 16
        %v487 = vsel %vm486, %v479, -1e+30
        %v488 = vsel %vm486, %v480, -1e+30
        %v489 = vld [vmem:[#allocation2] sm:$0xff]
        %v490 = vld [vmem:[#allocation2 + $0x8] sm:$0xff]
        %vm491 = vcmask 130048
        %v492 = vsel %vm491, %v487, -inf
        %493 = vmax.xlane.f32.xlu0 %v492
        %v494 = vpop.xlane.xlu0 %493
        %v495 = vsel %vm491, %v488, -inf
        %496 = vmax.xlane.f32.xlu0 %v495
        %v497 = vpop.xlane.xlu0 %496
        %v498 = vmax.f32 %v489, %v494
        %v499 = vmax.f32 %v490, %v497
        %v500 = vsub.f32 %v489, %v498
        %v501 = vsub.f32 %v490, %v499
        %v502 = vmul.f32 %v500, 1.442695
        %v503 = vpow.pop %v502
        %v504 = vmul.f32 %v501, 1.442695
        %v505 = vpow.pop %v504
        %507 = vset.pattern.permute.xlu0 0
        %508 = vperm.xlu0 %507, %v498
        %v509 = vpop.permute.xlu0 %508
        %512 = vset.pattern.permute.xlu0 0
        %513 = vperm.xlu0 %512, %v499
        %v514 = vpop.permute.xlu0 %513
        %v516 = vsub.f32 %v487, %v509
        %v517 = vsub.f32 %v488, %v514
        %v518 = vmul.f32 %v516, 1.442695
        %v519 = vpow.pop %v518
        %v520 = vmul.f32 %v517, 1.442695
        %v521 = vpow.pop %v520
        %v522 = vld [vmem:[#allocation3] sm:$0xff]
        %v523 = vld [vmem:[#allocation3 + $0x8] sm:$0xff]
        %v524 = vmul.f32 %v503, %v522
        %v525 = vmul.f32 %v505, %v523
        %v526 = vsel %vm491, %v519, 0.0
        %527 = vadd.xlane.f32.xlu0 %v526
        %v528 = vpop.xlane.xlu0 %527
        %v529 = vsel %vm491, %v521, 0.0
        %530 = vadd.xlane.f32.xlu0 %v529
        %v531 = vpop.xlane.xlu0 %530
        %v532 = vadd.f32 %v524, %v528
        %v533 = vadd.f32 %v525, %v531
        %vm534 = vcmask 7168
        %535 = vst.msk [vmem:[#allocation3] sm:$0xff] %vm534, %v532
        %536 = vst.msk [vmem:[#allocation3 + $0x8] sm:$0xff] %vm534, %v533
        %v537 = vld [vmem:[%s294] sm:$0xff]
        %v538 = vld [vmem:[%s294 + $0x8] sm:$0xff]
        %v540 = vsel %vm491, %v519, 0
        %v543 = vsel %vm491, %v521, 0
        %545 = vmatprep.subr.mxu0 0.0
        %546 = vmatpush1.msra.mxu0 0.0
        %547 = vmatprep.subr.mxu0 0.0
        %548 = vmatpush1.msra.mxu0 0.0
        %549 = vmatprep.subr.mxu0 0.0
        %550 = vmatpush1.msra.mxu0 0.0
        %551 = vmatprep.subr.mxu0 0.0
        %552 = vmatpush1.msra.mxu0 0.0
        %553 = vmatprep.subr.mxu0 0.0
        %554 = vmatpush1.msra.mxu0 0.0
        %555 = vmatprep.subr.mxu0 0.0
        %556 = vmatpush1.msra.mxu0 0.0
        %557 = vmatprep.subr.mxu0 0.0
        %558 = vmatpush1.msra.mxu0 0.0
        %559 = vmatprep.subr.mxu0 0.0
        %560 = vmatpush1.msra.mxu0 0.0
        %561 = vmatprep.subr.mxu0 0.0
        %562 = vmatpush1.msra.mxu0 0.0
        %563 = vmatprep.subr.mxu0 0.0
        %564 = vmatpush1.msra.mxu0 0.0
        %565 = vmatprep.subr.mxu0 0.0
        %566 = vmatpush1.msra.mxu0 0.0
        %567 = vmatprep.subr.mxu0 0.0
        %568 = vmatpush1.msra.mxu0 0.0
        %569 = vmatprep.subr.mxu0 0.0
        %570 = vmatpush1.msra.mxu0 0.0
        %571 = vmatprep.subr.mxu0 0.0
        %572 = vmatpush1.msra.mxu0 0.0
        %573 = vmatprep.subr.mxu0 0.0
        %574 = vmatpush1.msra.mxu0 %v538
        %575 = vmatprep.subr.mxu0 0.0
        %576 = vmatpush1.msra.mxu0 %v537
        %577 = vmatprep.subr.mxu0 0.0
        %578 = vmatpush2.msra.mxu0 0.0
        %579 = vmatprep.subr.mxu0 0.0
        %580 = vmatpush2.msra.mxu0 0.0
        %581 = vmatprep.subr.mxu0 0.0
        %582 = vmatpush2.msra.mxu0 0.0
        %583 = vmatprep.subr.mxu0 0.0
        %584 = vmatpush2.msra.mxu0 0.0
        %585 = vmatprep.subr.mxu0 0.0
        %586 = vmatpush2.msra.mxu0 0.0
        %587 = vmatprep.subr.mxu0 0.0
        %588 = vmatpush2.msra.mxu0 0.0
        %589 = vmatprep.subr.mxu0 0.0
        %590 = vmatpush2.msra.mxu0 0.0
        %591 = vmatprep.subr.mxu0 0.0
        %592 = vmatpush2.msra.mxu0 0.0
        %593 = vmatprep.subr.mxu0 0.0
        %594 = vmatpush2.msra.mxu0 0.0
        %595 = vmatprep.subr.mxu0 0.0
        %596 = vmatpush2.msra.mxu0 0.0
        %597 = vmatprep.subr.mxu0 0.0
        %598 = vmatpush2.msra.mxu0 0.0
        %599 = vmatprep.subr.mxu0 0.0
        %600 = vmatpush2.msra.mxu0 0.0
        %601 = vmatprep.subr.mxu0 0.0
        %602 = vmatpush2.msra.mxu0 0.0
        %603 = vmatprep.subr.mxu0 0.0
        %604 = vmatpush2.msra.mxu0 0.0
        %605 = vmatprep.subr.mxu0 0.0
        %606 = vmatpush2.msra.mxu0 0.0
        %607 = vmatprep.subr.mxu0 0.0
        %608 = vmatpush2.msra.mxu0 0.0
        %609 = vmatprep.mubr.f32.mxu0 0.0
        %610 = vmatmul.mubr.f32.gmra.mxu0 %v540
        %v611 = vpop.f32.mrf.mxu0
        %v612 = vadd.f32 0.0, %v611
        %v613 = vpop.f32.mrf.mxu0
        %614 = vmatprep.mubr.f32.mxu0 0.0
        %615 = vmatmul.mubr.f32.gmra.mxu0 %v543
        %v616 = vpop.f32.mrf.mxu0
        %v617 = vadd.f32 0.0, %v616
        %v618 = vpop.f32.mrf.mxu0
        %619 = vdwg.mxu0
        %v620 = vld [vmem:[#allocation4] sm:$0xff]
        %v621 = vld [vmem:[#allocation4 + $0x8] sm:$0xff]
        %623 = vset.pattern.permute.xlu0 0
        %624 = vperm.xlu0 %623, %v503
        %v625 = vpop.permute.xlu0 %624
        %628 = vset.pattern.permute.xlu0 0
        %629 = vperm.xlu0 %628, %v505
        %v630 = vpop.permute.xlu0 %629
        %v632 = vmul.f32 %v625, %v620
        %v633 = vmul.f32 %v630, %v621
        %v634 = vadd.f32 %v632, %v612
        %v635 = vadd.f32 %v633, %v617
        %636 = vst.msk [vmem:[#allocation4] sm:$0xff] %vm391, %v634
        %637 = vst.msk [vmem:[#allocation4 + $0x8] sm:$0xff] %vm391, %v635
        %638 = vst.msk [vmem:[#allocation2] sm:$0xff] %vm534, %v498
        %639 = vst.msk [vmem:[#allocation2 + $0x8] sm:$0xff] %vm534, %v499
        // Predicated region
        $region49: #{fused_sdpa.1} parent=35 // pred_check
          %p640 = pneg %p371
        $region50: #{fused_sdpa.1} parent=35 // pred_check_branch
          %642 = sbr.rel (%p640) target = $region52
        $region51: #{fused_sdpa.1} parent=35 // pred_region
          %v643 = vld [vmem:[#allocation3] sm:$0xff]
          %v644 = vld [vmem:[#allocation3 + $0x8] sm:$0xff]
          %v645 = vrcp.pop %v643
          %v646 = vrcp.pop %v644
          %v647 = vld [vmem:[#allocation4] sm:$0xff]
          %v648 = vld [vmem:[#allocation4 + $0x8] sm:$0xff]
          %650 = vset.pattern.permute.xlu0 0
          %651 = vperm.xlu0 %650, %v645
          %v652 = vpop.permute.xlu0 %651
          %655 = vset.pattern.permute.xlu0 0
          %656 = vperm.xlu0 %655, %v646
          %v657 = vpop.permute.xlu0 %656
          %v659 = vmul.f32 %v647, %v652
          %v660 = vmul.f32 %v648, %v657
          %661 = vst.msk [vmem:[%s344] sm:$0xff] %vm391, %v659
          %662 = vst.msk [vmem:[%s344 + $0x8] sm:$0xff] %vm391, %v660
        $region52: #{fused_sdpa.1} parent=35 // pred_fallthru
          _
        %s663 = sand.u32 %s167, 1
        %s664 = scalar_lea.sflag [#allocation7], %s663
        %s665 = sand.u32 %s167, 1
        %s666 = smul.addr %s665, 16
        %s667 = scalar_lea.vmem [#allocation10], %s666
        // Predicated region
        $region53: #{fused_sdpa.1} parent=35 // pred_check
          %p668 = pneg %p177
        $region54: #{fused_sdpa.1} parent=35 // pred_check_branch
          %670 = sbr.rel (%p668) target = $region56
        $region55: #{fused_sdpa.1} parent=35 // pred_region
          %s671 = smul.u32 2, %s30
          %s673 = ssub.s32 256, 256
          %674 = vsyncadd %s664, %s673
          %s675 = smul.addr %s29, 2
          %s676 = sadd.s32 %s671, %s675
          %s677 = smul.addr %s676, 128
          %s678 = scalar_lea.hbm %s4, %s677
          %s679 = sshll.u32 %s667, 4
          %s680 = int_to_ptr.vmem [resolvable:$true] %s679
          %685 = dma.vmem_to_hbm [thread:$0]  %s680, 256, %s678, %s664, 128, 128, 8
        $region56: #{fused_sdpa.1} parent=35 // pred_fallthru
          _
      $region36: #{fused_sdpa.1} parent=5 // pred_fallthru
        _
      %p686 = scmp.le.s32.totalorder 2, %s19
      // Predicated region
      $region57: #{fused_sdpa.1} parent=5 // pred_check
        %p687 = pneg %p686
      $region58: #{fused_sdpa.1} parent=5 // pred_check_branch
        %689 = sbr.rel (%p687) target = $region60
      $region59: #{fused_sdpa.1} parent=5 // pred_region
        %s690 = ssub.s32 %s19, 2
        // Predicated region
        $region61: #{fused_sdpa.1} parent=59 // pred_check
          %p691 = pneg %p183
        $region62: #{fused_sdpa.1} parent=59 // pred_check_branch
          %693 = sbr.rel (%p691) target = $region64
        $region63: #{fused_sdpa.1} parent=59 // pred_region
          %s694 = sand.u32 %s168, 1
          %s695 = scalar_lea.sflag [#allocation7], %s694
          %s696 = sand.u32 %s168, 1
          %s697 = smul.addr %s696, 16
          %s698 = scalar_lea.vmem [#allocation10], %s697
          %699 = dma.done %s695, 256
        $region64: #{fused_sdpa.1} parent=59 // pred_fallthru
          _
      $region60: #{fused_sdpa.1} parent=5 // pred_fallthru
        _
    $region6: #{fused_sdpa.1} parent=1 // loop_footer
      %s23 = sadd.s32 1, %s19
    $region7: #{fused_sdpa.1} parent=1 // loop_footer_branch
      %18 = sbr.rel target = $region3
    $region8: #{fused_sdpa.1} parent=1 // loop_exit
      _
    %700 = vsyncpa [#allocation6], 1
    %s701 = scalar_lea.sflag [#allocation6], 1
    %702 = vsyncpa %s701, 1
    %703 = vsyncpa [#allocation9], 1
    %s704 = scalar_lea.sflag [#allocation9], 1
    %705 = vsyncpa %s704, 1
    %706 = vsyncpa [#allocation7], 1
    %s707 = scalar_lea.sflag [#allocation7], 1
    %708 = vsyncpa %s707, 1

</llo_original>
